<compile_context>
chip_gen: v6e
topology: v6e:2x2x1
jax: 0.10.0
libtpu: 0.0.40
codegen_flags: <defaults>
</compile_context>

<pallas_src>
import functools

import jax
import jax.numpy as jnp
from jax.experimental import pallas as pl
from jax.experimental.pallas import tpu as pltpu


# ---------------------------------------------------------------------------
# Generic tiled matmul kernel:  out = act(A @ B + bias)
# ---------------------------------------------------------------------------
def _mm_kernel(a_ref, b_ref, bias_ref, o_ref, acc_ref, *, apply_relu):
    k = pl.program_id(1)

    @pl.when(k == 0)
    def _():
        acc_ref[...] = jnp.zeros_like(acc_ref)

    acc_ref[...] += jnp.dot(a_ref[...], b_ref[...],
                            preferred_element_type=jnp.float32)

    @pl.when(k == pl.num_programs(1) - 1)
    def _():
        r = acc_ref[...] + bias_ref[...]
        if apply_relu:
            r = jnp.maximum(r, 0.0)
        o_ref[...] = r.astype(o_ref.dtype)


def _round_up(x, m):
    return (x + m - 1) // m * m


def fused_matmul(a, b, bias=None, *, apply_relu=False, tm=256, tk=512):
    """act(A @ B + bias): A,B streamed as bf16 tiles, f32 accumulation/epilogue."""
    M, K = a.shape
    Kb, C = b.shape
    assert K == Kb

    tm = min(tm, _round_up(M, 8))       # sublane-aligned row tile
    tk = min(tk, _round_up(K, 128))     # lane-aligned reduction tile
    Mp = _round_up(M, tm)
    Kp = _round_up(K, tk)

    a_p = jnp.zeros((Mp, Kp), jnp.bfloat16).at[:M, :K].set(a.astype(jnp.bfloat16))
    b_p = jnp.zeros((Kp, C), jnp.bfloat16).at[:K, :].set(b.astype(jnp.bfloat16))
    if bias is None:
        bias = jnp.zeros((C,), jnp.float32)
    bias_row = bias.reshape(1, C).astype(jnp.float32)

    grid = (Mp // tm, Kp // tk)
    out = pl.pallas_call(
        functools.partial(_mm_kernel, apply_relu=apply_relu),
        out_shape=jax.ShapeDtypeStruct((Mp, C), jnp.float32),
        grid_spec=pltpu.PrefetchScalarGridSpec(
            num_scalar_prefetch=0,
            grid=grid,
            in_specs=[
                pl.BlockSpec((tm, tk), lambda i, k: (i, k)),
                pl.BlockSpec((tk, C), lambda i, k: (k, 0)),
                pl.BlockSpec((1, C), lambda i, k: (0, 0)),
            ],
            out_specs=pl.BlockSpec((tm, C), lambda i, k: (i, 0)),
            scratch_shapes=[pltpu.VMEM((tm, C), jnp.float32)],
        ),
        compiler_params=pltpu.CompilerParams(
            dimension_semantics=("parallel", "arbitrary"),
            vmem_limit_bytes=32 * 1024 * 1024,
        ),
    )(a_p, b_p, bias_row)
    return out[:M]


# ---------------------------------------------------------------------------
# Graph preprocessing (plain JAX glue)
# ---------------------------------------------------------------------------
def build_normalized_adjacency(edge_index, num_nodes):
    """Dense A_hat = D^-1/2 (A + I) D^-1/2, matching PyG gcn_norm (add_self_loops)."""
    src = edge_index[0]
    dst = edge_index[1]
    adj = jnp.zeros((num_nodes, num_nodes), jnp.float32)
    adj = adj.at[dst, src].add(1.0)                 # scatter-add: duplicates counted
    adj = adj + jnp.eye(num_nodes, dtype=jnp.float32)   # add self-loops
    deg = adj.sum(axis=1)
    dinv = jnp.where(deg > 0.0, jax.lax.rsqrt(deg), 0.0)
    return dinv[:, None] * adj * dinv[None, :]


# ---------------------------------------------------------------------------
# GCN forward
# ---------------------------------------------------------------------------
def gcn_forward(x, edge_index, params):
    w1, b1, bn_g, bn_b, bn_mu, bn_var, w2, b2 = params
    n = x.shape[0]
    f_in, hidden = w1.shape
    num_classes = w2.shape[1]

    a_hat = build_normalized_adjacency(edge_index, n)

    # Fold eval-mode BatchNorm1d into conv1 weight / bias:
    #   BN(A@X@W1 + b1) == A@X@(W1*s) + (b1 - mu)*s + beta,  s = g * rsqrt(var+eps)
    scale = bn_g * jax.lax.rsqrt(bn_var + 1e-5)
    w1_f = w1 * scale[None, :]
    b1_f = (b1 - bn_mu) * scale + bn_b

    x = x.astype(jnp.float32)

    # --- Layer 1: relu(BN(A_hat @ X @ W1 + b1))
    # Order the two matmuls so the O(N^2) propagation streams min(F, H) columns.
    if f_in <= hidden:
        agg = fused_matmul(a_hat, x)                               # A_hat @ X
        h1 = fused_matmul(agg, w1_f, b1_f, apply_relu=True)        # (.) @ W1' + b1'
    else:
        z1 = fused_matmul(x, w1_f)                                 # X @ W1'
        h1 = fused_matmul(a_hat, z1, b1_f, apply_relu=True)        # A_hat @ (.) + b1'

    # TODO(synk): F.dropout(training=True) is stochastic; inference-mode identity used here.

    # --- Layer 2: relu(A_hat @ H1 @ W2 + b2)
    if hidden <= num_classes:
        agg2 = fused_matmul(a_hat, h1)
        out = fused_matmul(agg2, w2, b2, apply_relu=True)
    else:
        z2 = fused_matmul(h1, w2)
        out = fused_matmul(a_hat, z2, b2, apply_relu=True)
    return out


def init_params(key, num_node_features, num_classes, hidden=32):
    k1, k2, k3, k4 = jax.random.split(key, 4)
    w1 = jax.random.normal(k1, (num_node_features, hidden), jnp.float32) * 0.1
    b1 = jnp.zeros((hidden,), jnp.float32)
    bn_gamma = jnp.ones((hidden,), jnp.float32)
    bn_beta = jnp.zeros((hidden,), jnp.float32)
    bn_mean = jax.random.normal(k2, (hidden,), jnp.float32) * 0.01
    bn_var = jnp.ones((hidden,), jnp.float32)
    w2 = jax.random.normal(k3, (hidden, num_classes), jnp.float32) * 0.1
    b2 = jax.random.normal(k4, (num_classes,), jnp.float32) * 0.01
    return (w1, b1, bn_gamma, bn_beta, bn_mean, bn_var, w2, b2)


if __name__ == "__main__":
    key = jax.random.PRNGKey(0)
    k_x, k_e, k_p = jax.random.split(key, 3)

    num_nodes = 16
    num_node_features = 16
    num_classes = 8
    num_undirected_edges = 20

    # Node features
    x = jax.random.normal(k_x, (num_nodes, num_node_features), jnp.float32)

    # Random undirected edge list -> edge_index [2, 2*num_undirected_edges]
    pairs = jax.random.randint(k_e, (2, num_undirected_edges), 0, num_nodes)
    edge_index = jnp.concatenate(
        [pairs, jnp.stack([pairs[1], pairs[0]])], axis=1
    ).astype(jnp.int32)

    params = init_params(k_p, num_node_features, num_classes)

    out = gcn_forward(x, edge_index, params)
    jax.block_until_ready(out)
    assert out.shape == (num_nodes, num_classes)

    # Pure-JAX reference (eval-mode BN, no dropout) — loose check (bf16 streaming).
    w1, b1, g, beta, mu, var, w2, b2 = params
    a_hat = build_normalized_adjacency(edge_index, num_nodes)
    h = a_hat @ (x @ w1) + b1
    h = (h - mu) * jax.lax.rsqrt(var + 1e-5) * g + beta
    h = jnp.maximum(h, 0.0)
    ref = jnp.maximum(a_hat @ (h @ w2) + b2, 0.0)
    max_err = float(jnp.max(jnp.abs(out - ref)))
    assert max_err < 5e-2, f"max abs error too large: {max_err}"

    print("KERNEL_OK")
</pallas_src>

<mosaic_0001>
module attributes {stable_mosaic.version = 11 : i64} {
  func.func @_mm_kernel(%arg0: i32, %arg1: i32, %arg2: memref<16x128xbf16, #tpu.memory_space<vmem>>, %arg3: memref<128x16xbf16, #tpu.memory_space<vmem>>, %arg4: memref<1x16xf32, #tpu.memory_space<vmem>>, %arg5: memref<16x16xf32, #tpu.memory_space<vmem>>, %arg6: memref<16x16xf32, #tpu.memory_space<vmem>>) attributes {dimension_semantics = [#tpu.dimension_semantics<parallel>, #tpu.dimension_semantics<arbitrary>], iteration_bounds = array<i64: 1, 1>, scalar_prefetch = 0 : i64, scratch_operands = 1 : i64, tpu.core_type = #tpu.core_type<tc>, window_params = [{transform_indices = @transform_0, window_bounds = array<i64: 16, 128>}, {transform_indices = @transform_1, window_bounds = array<i64: 128, 16>}, {pipeline_mode = #tpu.pipeline_mode<synchronous>, transform_indices = @transform_2, window_bounds = array<i64: 1, 16>}, {transform_indices = @transform_3, window_bounds = array<i64: 16, 16>}]} {
    %c0_i32 = arith.constant 0 : i32
    %0 = arith.cmpi eq, %arg1, %c0_i32 : i32
    %1 = arith.extui %0 : i1 to i32
    %c0_i32_0 = arith.constant 0 : i32
    %2 = arith.cmpi ne, %1, %c0_i32_0 : i32
    scf.if %2 {
      %cst_10 = arith.constant 0.000000e+00 : f32
      %12 = vector.broadcast %cst_10 : f32 to vector<16x16xf32>
      %c0_11 = arith.constant 0 : index
      %c0_12 = arith.constant 0 : index
      %13 = vector.load %arg6[%c0_11, %c0_12] : memref<16x16xf32, #tpu.memory_space<vmem>>, vector<16x16xf32>
      tpu.vector_store %arg6[%c0_11, %c0_12], %12 {strides = array<i32>} : memref<16x16xf32, #tpu.memory_space<vmem>>, vector<16x16xf32>,
    } else {
    }
    %c0 = arith.constant 0 : index
    %c0_1 = arith.constant 0 : index
    %3 = vector.load %arg6[%c0, %c0_1] : memref<16x16xf32, #tpu.memory_space<vmem>>, vector<16x16xf32>
    %c0_2 = arith.constant 0 : index
    %c0_3 = arith.constant 0 : index
    %4 = vector.load %arg2[%c0_2, %c0_3] : memref<16x128xbf16, #tpu.memory_space<vmem>>, vector<16x128xbf16>
    %c0_4 = arith.constant 0 : index
    %c0_5 = arith.constant 0 : index
    %5 = vector.load %arg3[%c0_4, %c0_5] : memref<128x16xbf16, #tpu.memory_space<vmem>>, vector<128x16xbf16>
    %cst = arith.constant dense<0.000000e+00> : vector<16x16xf32>
    %6 = tpu.matmul %4, %5, %cst {dimension_numbers = #tpu.dot_dimension_numbers<[1], [0], [0], [1], [0, 0, 1, 1], [], []>} : vector<16x128xbf16>, vector<128x16xbf16>, vector<16x16xf32> -> vector<16x16xf32>
    %7 = arith.addf %3, %6 : vector<16x16xf32>
    %c0_6 = arith.constant 0 : index
    %c0_7 = arith.constant 0 : index
    %8 = vector.load %arg6[%c0_6, %c0_7] : memref<16x16xf32, #tpu.memory_space<vmem>>, vector<16x16xf32>
    tpu.vector_store %arg6[%c0_6, %c0_7], %7 {strides = array<i32>} : memref<16x16xf32, #tpu.memory_space<vmem>>, vector<16x16xf32>,
    %c0_i32_8 = arith.constant 0 : i32
    %9 = arith.cmpi eq, %arg1, %c0_i32_8 : i32
    %10 = arith.extui %9 : i1 to i32
    %c0_i32_9 = arith.constant 0 : i32
    %11 = arith.cmpi ne, %10, %c0_i32_9 : i32
    scf.if %11 {
      %c0_10 = arith.constant 0 : index
      %c0_11 = arith.constant 0 : index
      %12 = vector.load %arg6[%c0_10, %c0_11] : memref<16x16xf32, #tpu.memory_space<vmem>>, vector<16x16xf32>
      %c0_12 = arith.constant 0 : index
      %c0_13 = arith.constant 0 : index
      %13 = vector.load %arg4[%c0_12, %c0_13] : memref<1x16xf32, #tpu.memory_space<vmem>>, vector<1x16xf32>
      %14 = vector.broadcast %13 : vector<1x16xf32> to vector<16x16xf32>
      %15 = arith.addf %12, %14 : vector<16x16xf32>
      %c0_14 = arith.constant 0 : index
      %c0_15 = arith.constant 0 : index
      %16 = vector.load %arg5[%c0_14, %c0_15] : memref<16x16xf32, #tpu.memory_space<vmem>>, vector<16x16xf32>
      tpu.vector_store %arg5[%c0_14, %c0_15], %15 {strides = array<i32>} : memref<16x16xf32, #tpu.memory_space<vmem>>, vector<16x16xf32>,
    } else {
    }
    return
  }
  func.func @transform_0(%arg0: i32, %arg1: i32) -> (i32, i32) {
    %c0_i32 = arith.constant 0 : i32
    return %arg0, %arg1 : i32, i32
  }
  func.func @transform_1(%arg0: i32, %arg1: i32) -> (i32, i32) {
    %c0_i32 = arith.constant 0 : i32
    %c0_i32_0 = arith.constant 0 : i32
    return %arg1, %c0_i32 : i32, i32
  }
  func.func @transform_2(%arg0: i32, %arg1: i32) -> (i32, i32) {
    %c0_i32 = arith.constant 0 : i32
    %c0_i32_0 = arith.constant 0 : i32
    %c0_i32_1 = arith.constant 0 : i32
    return %c0_i32, %c0_i32_0 : i32, i32
  }
  func.func @transform_3(%arg0: i32, %arg1: i32) -> (i32, i32) {
    %c0_i32 = arith.constant 0 : i32
    %c0_i32_0 = arith.constant 0 : i32
    return %arg0, %c0_i32 : i32, i32
  }
}

</mosaic_0001>

<llo_original>
// kernel: tpu_custom_call.1
$region0: #{tpu_custom_call.1}
  #allocation0 [shape = 'u32[]', space=smem, size = 0x4, offset = 0x4, fixed_abs, tag = 'smem constant byte address 0x4 - core index']
  #allocation1 [shape = 'u32[144,128]{1,0:T(1,128)}', space=vmem, size = 0x12000, scoped, tag = 'internal scratch']
  #allocation2 [shape = 'f32[16,16]{1,0:T(8,128)}', space=vmem, size = 0x2000, scoped, tag = 'scratch operand']
  %s0 = inlined_call_operand.vmem [shape: bf16[16,128], index: 0, kind: input, shape index: {}]
  %s1 = inlined_call_operand.vmem [shape: bf16[128,16], index: 1, kind: input, shape index: {}]
  %s2 = inlined_call_operand.vmem [shape: f32[1,16], index: 2, kind: input, shape index: {}]
  %s3 = inlined_call_operand.hbm [shape: f32[16,16], index: 3, kind: output, shape index: {}]
  %s4 = sld [smem:[#allocation0]]
  $region30: #{tpu_custom_call.1} parent=0
    _
  %s6 = ssub.s32 1, %s4
  %s7 = scalar_select 0, %s6, %s4
  $region1: #{tpu_custom_call.1} parent=0
    #allocation3 [shape = 'u8[8192]{0}', space=vmem, size = 0x2000, scoped, tag = 'output window, operand 0, single buffered']
    #allocation4 [shape = 's32[1]{0}', space=sflag, size = 0x4, scoped, tag = 'scoped memory for tpu_custom_call.1']
    %8 = vsyncpa [#allocation4], 0
    // Predicated region
    $region2: #{tpu_custom_call.1} parent=1 // pred_check
      _
    $region3: #{tpu_custom_call.1} parent=1 // pred_check_branch
      %10 = sbr.rel (0) target = $region5
    $region4: #{tpu_custom_call.1} parent=1 // pred_region
      _
    $region5: #{tpu_custom_call.1} parent=1 // pred_fallthru
      _
    // Predicated region
    $region6: #{tpu_custom_call.1} parent=1 // pred_check
      _
    $region7: #{tpu_custom_call.1} parent=1 // pred_check_branch
      %12 = sbr.rel (0) target = $region9
    $region8: #{tpu_custom_call.1} parent=1 // pred_region
      _
    $region9: #{tpu_custom_call.1} parent=1 // pred_fallthru
      _
    // Predicated region
    $region10: #{tpu_custom_call.1} parent=1 // pred_check
      _
    $region11: #{tpu_custom_call.1} parent=1 // pred_check_branch
      %14 = sbr.rel (0) target = $region13
    $region12: #{tpu_custom_call.1} parent=1 // pred_region
      _
    $region13: #{tpu_custom_call.1} parent=1 // pred_fallthru
      _
    %p16 = scmp.eq.s32.totalorder 0, 0
    // Predicated region
    $region14: #{tpu_custom_call.1} parent=1 // pred_check
      %p17 = pneg %p16
    $region15: #{tpu_custom_call.1} parent=1 // pred_check_branch
      %19 = sbr.rel (%p17) target = $region17
    $region16: #{tpu_custom_call.1} parent=1 // pred_region
      %vm20 = vcmask 130048
      %21 = vst.msk [vmem:[#allocation2] sm:$0xff] %vm20, 0.0
      %22 = vst.msk [vmem:[#allocation2 + $0x8] sm:$0xff] %vm20, 0.0
    $region17: #{tpu_custom_call.1} parent=1 // pred_fallthru
      _
    %v23 = vld [vmem:[#allocation2] sm:$0xff]
    %v24 = vld [vmem:[#allocation2 + $0x8] sm:$0xff]
    %v25 = vld [vmem:[%s0] sm:$0xf]
    %v26 = vld [vmem:[%s0 + $0x4] sm:$0xf]
    %v27 = vld [vmem:[%s1] sm:$0xf]
    %v28 = vld [vmem:[%s1 + $0x4] sm:$0xf]
    %v29 = vld [vmem:[%s1 + $0x8] sm:$0xf]
    %v30 = vld [vmem:[%s1 + $0xc] sm:$0xf]
    %v31 = vld [vmem:[%s1 + $0x10] sm:$0xf]
    %v32 = vld [vmem:[%s1 + $0x14] sm:$0xf]
    %v33 = vld [vmem:[%s1 + $0x18] sm:$0xf]
    %v34 = vld [vmem:[%s1 + $0x1c] sm:$0xf]
    %v35 = vld [vmem:[%s1 + $0x20] sm:$0xf]
    %v36 = vld [vmem:[%s1 + $0x24] sm:$0xf]
    %v37 = vld [vmem:[%s1 + $0x28] sm:$0xf]
    %v38 = vld [vmem:[%s1 + $0x2c] sm:$0xf]
    %v39 = vld [vmem:[%s1 + $0x30] sm:$0xf]
    %v40 = vld [vmem:[%s1 + $0x34] sm:$0xf]
    %v41 = vld [vmem:[%s1 + $0x38] sm:$0xf]
    %v42 = vld [vmem:[%s1 + $0x3c] sm:$0xf]
    %v45 = vunpack.c.l.b16 %v25
    %v46 = vunpack.c.l.b16 %v26
    %v47 = vpack.c.b16 %v46, %v45
    %v65 = vunpack.c.l.b16 %v27
    %v66 = vunpack.c.l.b16 %v28
    %v67 = vunpack.c.l.b16 %v29
    %v68 = vunpack.c.l.b16 %v30
    %v69 = vunpack.c.l.b16 %v31
    %v70 = vunpack.c.l.b16 %v32
    %v71 = vunpack.c.l.b16 %v33
    %v72 = vunpack.c.l.b16 %v34
    %v73 = vunpack.c.l.b16 %v35
    %v74 = vunpack.c.l.b16 %v36
    %v75 = vunpack.c.l.b16 %v37
    %v76 = vunpack.c.l.b16 %v38
    %v77 = vunpack.c.l.b16 %v39
    %v78 = vunpack.c.l.b16 %v40
    %v79 = vunpack.c.l.b16 %v41
    %v80 = vunpack.c.l.b16 %v42
    %v81 = vpack.c.b16 %v66, %v65
    %v82 = vpack.c.b16 %v68, %v67
    %v83 = vpack.c.b16 %v70, %v69
    %v84 = vpack.c.b16 %v72, %v71
    %v85 = vpack.c.b16 %v74, %v73
    %v86 = vpack.c.b16 %v76, %v75
    %v87 = vpack.c.b16 %v78, %v77
    %v88 = vpack.c.b16 %v80, %v79
    %97 = vmatprep.subr.bf16.mxu0 0
    %98 = vmatpush1.bf16.msra.mxu0 %v88
    %99 = vmatprep.subr.bf16.mxu0 0
    %100 = vmatpush1.bf16.msra.mxu0 %v87
    %101 = vmatprep.subr.bf16.mxu0 0
    %102 = vmatpush1.bf16.msra.mxu0 %v86
    %103 = vmatprep.subr.bf16.mxu0 0
    %104 = vmatpush1.bf16.msra.mxu0 %v85
    %105 = vmatprep.subr.bf16.mxu0 0
    %106 = vmatpush1.bf16.msra.mxu0 %v84
    %107 = vmatprep.subr.bf16.mxu0 0
    %108 = vmatpush1.bf16.msra.mxu0 %v83
    %109 = vmatprep.subr.bf16.mxu0 0
    %110 = vmatpush1.bf16.msra.mxu0 %v82
    %111 = vmatprep.subr.bf16.mxu0 0
    %112 = vmatpush1.bf16.msra.mxu0 %v81
    %113 = vmatprep.subr.bf16.mxu0 0
    %114 = vmatpush2.bf16.msra.mxu0 0
    %115 = vmatprep.subr.bf16.mxu0 0
    %116 = vmatpush2.bf16.msra.mxu0 0
    %117 = vmatprep.subr.bf16.mxu0 0
    %118 = vmatpush2.bf16.msra.mxu0 0
    %119 = vmatprep.subr.bf16.mxu0 0
    %120 = vmatpush2.bf16.msra.mxu0 0
    %121 = vmatprep.subr.bf16.mxu0 0
    %122 = vmatpush2.bf16.msra.mxu0 0
    %123 = vmatprep.subr.bf16.mxu0 0
    %124 = vmatpush2.bf16.msra.mxu0 0
    %125 = vmatprep.subr.bf16.mxu0 0
    %126 = vmatpush2.bf16.msra.mxu0 0
    %127 = vmatprep.subr.bf16.mxu0 0
    %128 = vmatpush2.bf16.msra.mxu0 0
    %129 = vmatprep.mubr.bf16.mxu0 0
    %130 = vmatmul.mubr.bf16.gmra.mxu0 %v47
    %v131 = vpop.f32.mrf.mxu0
    %v132 = vadd.f32 0.0, %v131
    %v133 = vpop.f32.mrf.mxu0
    %v134 = vpop.f32.mrf.mxu0
    %v135 = vadd.f32 0.0, %v134
    %v136 = vpop.f32.mrf.mxu0
    %137 = vdwg.mxu0
    %v138 = vadd.f32 %v23, %v132
    %v139 = vadd.f32 %v24, %v135
    %vm140 = vcmask 130048
    %141 = vst.msk [vmem:[#allocation2] sm:$0xff] %vm140, %v138
    %142 = vst.msk [vmem:[#allocation2 + $0x8] sm:$0xff] %vm140, %v139
    // Predicated region
    $region18: #{tpu_custom_call.1} parent=1 // pred_check
      %p143 = pneg %p16
    $region19: #{tpu_custom_call.1} parent=1 // pred_check_branch
      %145 = sbr.rel (%p143) target = $region21
    $region20: #{tpu_custom_call.1} parent=1 // pred_region
      %v146 = vld [vmem:[#allocation2] sm:$0xff]
      %v147 = vld [vmem:[#allocation2 + $0x8] sm:$0xff]
      %v148 = vld [vmem:[%s2] sm:$0x1]
      %v150 = vlaneseq
      %v151 = vshrl.u32 %v150, 7
      %v152 = vsub.s32 0, %v151
      %v153 = vrot.slane %v148, %v152
      %v155 = vadd.f32 %v146, %v153
      %v156 = vadd.f32 %v147, %v153
      %157 = vst.msk [vmem:[#allocation3] sm:$0xff] %vm140, %v155
      %158 = vst.msk [vmem:[#allocation3 + $0x8] sm:$0xff] %vm140, %v156
    $region21: #{tpu_custom_call.1} parent=1 // pred_fallthru
      _
    // Predicated region
    $region22: #{tpu_custom_call.1} parent=1 // pred_check
      _
    $region23: #{tpu_custom_call.1} parent=1 // pred_check_branch
      %160 = sbr.rel (0) target = $region25
    $region24: #{tpu_custom_call.1} parent=1 // pred_region
      %s162 = ssub.s32 256, 256
      %163 = vsyncadd [#allocation4], %s162
      %s164 = sshll.u32 [#allocation3], 4
      %s165 = int_to_ptr.vmem [resolvable:$true] %s164
      %170 = dma.vmem_to_hbm [thread:$0]  %s165, 256, %s3, [#allocation4], 128, 128, 8
    $region25: #{tpu_custom_call.1} parent=1 // pred_fallthru
      _
    // Predicated region
    $region26: #{tpu_custom_call.1} parent=1 // pred_check
      _
    $region27: #{tpu_custom_call.1} parent=1 // pred_check_branch
      %172 = sbr.rel (0) target = $region29
    $region28: #{tpu_custom_call.1} parent=1 // pred_region
      %173 = dma.done [#allocation4], 256
    $region29: #{tpu_custom_call.1} parent=1 // pred_fallthru
      _
    %174 = vsyncpa [#allocation4], 1

</llo_original>
